<compile_context>
chip_gen: v7x
topology: tpu7x:2x2x1
jax: 0.10.0
libtpu: 0.0.40
codegen_flags: <defaults>
</compile_context>

<pallas_src>
import functools
import math

import jax
import jax.numpy as jnp
from jax.experimental import pallas as pl
from jax.experimental.pallas import tpu as pltpu


def _round_up(x, m):
    return ((x + m - 1) // m) * m


def _vmem_capacity_bytes():
    """Per-core VMEM capacity, with a conservative fallback (v7x = 64 MiB)."""
    try:
        info = pltpu.get_tpu_info()
        cap = getattr(info, "vmem_capacity_bytes", None)
        if cap:
            return int(cap)
    except Exception:
        pass
    return 64 << 20


def _tcl_kernel(counts_ref, fetch_ref, itype_ref, x_ref, w_ref, b_ref, o_ref,
                *, n_types, resident):
    del fetch_ref                     # only consumed by the weight index_maps
    i = pl.program_id(0)              # batch tile
    t = pl.program_id(2)              # type step (innermost, "arbitrary")

    # Fresh output tile: start from NaN so rows whose type never matches any
    # t in [0, n_types) keep torch's fill_(nan) semantics.  The output block
    # index is invariant along t, so o_ref stays VMEM-resident and doubles as
    # the accumulator (no scratch, no final copy).
    @pl.when(t == 0)
    def _():
        o_ref[...] = jnp.full(o_ref.shape, jnp.nan, o_ref.dtype)

    # Per-batch-tile skip: types absent from THIS tile cost neither the MXU
    # pass nor the full-tile select (and, in the streamed path, no weight DMA
    # either -- their fetch index repeats the previous present type's block).
    @pl.when(counts_ref[i * n_types + t] > 0)
    def _():
        if resident:
            w = w_ref[t]              # (K, to): dynamic leading-axis slice
            b = b_ref[t]              # (1, to)
        else:
            w = w_ref[0]
            b = b_ref[0]
        # (tb, K) x (K, to) on the MXU; f32 accumulation even for bf16 inputs.
        y = jnp.dot(x_ref[...], w, preferred_element_type=jnp.float32) + b
        mask = itype_ref[...] == t    # (tb, 1) broadcasts over lanes
        o_ref[...] = jnp.where(mask, y, o_ref[...]).astype(o_ref.dtype)


def type_conditional_linear(x, i_type, weight, bias, *,
                            block_b=512, block_out=512,
                            compute_dtype=jnp.float32,
                            weight_resident=None):
    B, in_f = x.shape
    n_types, out_f, _ = weight.shape

    cd_bytes = jnp.dtype(compute_dtype).itemsize

    # ---- hardware-derived VMEM budget & tile selection ----------------------
    cap = _vmem_capacity_bytes()
    budget = cap - (8 << 20)                       # headroom for Mosaic scratch

    to = min(_round_up(out_f, 128), _round_up(block_out, 128))
    tb = min(_round_up(B, 8), _round_up(block_b, 8))

    def footprint(tb_, to_, resident_):
        wt = n_types if resident_ else 1
        return (2 * tb_ * in_f * cd_bytes          # x (double-buffered)
                + 2 * wt * in_f * to_ * cd_bytes   # weight
                + 2 * wt * to_ * 4                 # bias (f32)
                + 2 * tb_ * 4                      # i_type (int32)
                + 2 * tb_ * to_ * 4)               # output tile / accumulator

    # Auto-shrink tiles until the streamed-weight footprint fits the budget
    # (instead of capping vmem_limit_bytes below the real requirement).
    while footprint(tb, to, False) > budget and (tb > 8 or to > 128):
        if to > 128 and (in_f * to * cd_bytes) >= (tb * in_f * cd_bytes):
            to = _round_up(max(128, to // 2), 128)
        elif tb > 8:
            tb = _round_up(max(8, tb // 2), 8)
        else:
            to = _round_up(max(128, to // 2), 128)

    # Resident weights: keep every type's weight slab for one output tile in
    # VMEM when it fits -> one weight DMA per output tile instead of
    # nb x present_types.
    if weight_resident is None:
        weight_resident = footprint(tb, to, True) <= budget
    resident = bool(weight_resident)

    out_p = _round_up(out_f, to)
    B_p = _round_up(B, tb)
    nb = B_p // tb
    no = out_p // to

    # ---- one-time layout prep (XLA side) ------------------------------------
    # K-major weight (n_types, in_f, out_p), lane-dense padded output columns.
    w_t = jnp.transpose(weight, (0, 2, 1)).astype(compute_dtype)
    w_t = jnp.pad(w_t, ((0, 0), (0, 0), (0, out_p - out_f)))
    b_p = jnp.pad(bias.astype(jnp.float32), ((0, 0), (0, out_p - out_f)))
    b_p = b_p.reshape(n_types, 1, out_p)

    x_p = jnp.pad(x, ((0, B_p - B), (0, 0))).astype(compute_dtype)

    it = i_type.astype(jnp.int32)
    # Padded rows get type -1 -> never match -> NaN -> sliced off below.
    it_p = jnp.pad(it, (0, B_p - B), constant_values=-1)

    # ---- per-batch-tile scalar-prefetch tables (SMEM, flattened 1-D) --------
    type_ids = jnp.arange(n_types, dtype=jnp.int32)
    it_tiles = it_p.reshape(nb, tb)
    counts = jnp.sum(it_tiles[:, None, :] == type_ids[None, :, None],
                     axis=-1).astype(jnp.int32)                    # (nb, T)
    # For types absent from a tile, re-use the previous present type's weight
    # block index so the weight DMA is elided on that grid step.
    run_idx = jax.lax.cummax(jnp.where(counts > 0, type_ids[None, :], -1),
                             axis=1)
    fetch_idx = jnp.maximum(run_idx, 0).astype(jnp.int32)          # (nb, T)
    counts_flat = counts.reshape(-1)
    fetch_flat = fetch_idx.reshape(-1)

    it_col = it_p.reshape(B_p, 1)

    # ---- specs ---------------------------------------------------------------
    if resident:
        w_spec = pl.BlockSpec((n_types, in_f, to),
                              lambda i, j, t, c, f: (0, 0, j))
        b_spec = pl.BlockSpec((n_types, 1, to),
                              lambda i, j, t, c, f: (0, 0, j))
    else:
        w_spec = pl.BlockSpec((1, in_f, to),
                              lambda i, j, t, c, f: (f[i * n_types + t], 0, j))
        b_spec = pl.BlockSpec((1, 1, to),
                              lambda i, j, t, c, f: (f[i * n_types + t], 0, j))

    grid_spec = pltpu.PrefetchScalarGridSpec(
        num_scalar_prefetch=2,
        grid=(nb, no, n_types),
        in_specs=[
            pl.BlockSpec((tb, 1), lambda i, j, t, c, f: (i, 0)),      # i_type
            pl.BlockSpec((tb, in_f), lambda i, j, t, c, f: (i, 0)),   # x
            w_spec,                                                   # weight
            b_spec,                                                   # bias
        ],
        out_specs=pl.BlockSpec((tb, to), lambda i, j, t, c, f: (i, j)),
    )

    fp = footprint(tb, to, resident)
    vmem_limit = int(min(cap - (4 << 20), max(fp + (8 << 20), 16 << 20)))

    kernel = functools.partial(_tcl_kernel, n_types=n_types, resident=resident)

    out = pl.pallas_call(
        kernel,
        out_shape=jax.ShapeDtypeStruct((B_p, out_p), jnp.float32),
        grid_spec=grid_spec,
        compiler_params=pltpu.CompilerParams(
            dimension_semantics=("parallel", "parallel", "arbitrary"),
            vmem_limit_bytes=vmem_limit,
        ),
    )(counts_flat, fetch_flat, it_col, x_p, w_t, b_p)

    return out[:B, :out_f]


def init_params(key, in_features, out_features, n_types):
    """Deterministic init mimicking the module's reset_parameters()."""
    kw, kb = jax.random.split(key)
    # kaiming_uniform_(a=sqrt(5)) on (out, in) => bound = 1/sqrt(fan_in)
    w_bound = 1.0 / math.sqrt(in_features)
    weight = jax.random.uniform(
        kw, (n_types, out_features, in_features),
        minval=-w_bound, maxval=w_bound, dtype=jnp.float32)
    b_bound = 1.0 / math.sqrt(in_features)
    bias = jax.random.uniform(
        kb, (n_types, out_features),
        minval=-b_bound, maxval=b_bound, dtype=jnp.float32)
    return weight, bias


if __name__ == "__main__":
    B = 16
    in_features = 32
    out_features = 48        # not a multiple of 128 -> exercises lane padding
    n_types = 4

    key = jax.random.PRNGKey(0)
    kx, kt, kp = jax.random.split(key, 3)

    x = jax.random.normal(kx, (B, in_features), dtype=jnp.float32)
    # torch uses int64; int32 is the TPU-friendly equivalent (small indices).
    i_type = jax.random.randint(kt, (B,), 0, n_types, dtype=jnp.int32)
    i_type = jnp.where(i_type == 2, 0, i_type)     # type 2 absent -> skip path
    i_type = i_type.at[0].set(n_types - 1)         # last type present
    i_type = i_type.at[B - 1].set(n_types + 3)     # out-of-range -> NaN row

    weight, bias = init_params(kp, in_features, out_features, n_types)

    # Pure-JAX reference for rows with a valid type.
    valid = i_type < n_types
    safe_t = jnp.where(valid, i_type, 0)
    ref = jnp.einsum("bi,boi->bo", x, weight[safe_t]) + bias[safe_t]

    def check(out, atol, rtol, name):
        assert out.shape == (B, out_features), (name, out.shape)
        assert out.dtype == jnp.float32, (name, out.dtype)
        v = valid[:, None]
        # NaN exactly on (and only on) rows whose type is out of range.
        assert bool(jnp.all(jnp.isnan(out) == ~v)), f"{name}: NaN pattern wrong"
        err = jnp.max(jnp.abs(jnp.where(v, out - ref, 0.0)))
        tol = atol + rtol * jnp.max(jnp.abs(ref))
        assert bool(err <= tol), f"{name}: max abs err = {float(err)}"

    # 1) default path: f32 compute, resident weights at these shapes.
    out = jax.block_until_ready(type_conditional_linear(x, i_type, weight, bias))
    check(out, 1e-5, 1e-5, "auto")

    # 2) forced streamed-weight path (per-tile skip + fetch-table DMA dedup).
    out_s = jax.block_until_ready(
        type_conditional_linear(x, i_type, weight, bias, weight_resident=False))
    check(out_s, 1e-5, 1e-5, "streamed")

    # 3) bf16 inputs with f32 accumulation (looser tolerance vs fp32 reference).
    out_bf = jax.block_until_ready(
        type_conditional_linear(x, i_type, weight, bias,
                                compute_dtype=jnp.bfloat16))
    check(out_bf, 5e-2, 5e-2, "bf16")

    print("KERNEL_OK")
</pallas_src>

<mosaic_0001>
module attributes {stable_mosaic.version = 11 : i64} {
  func.func @_tcl_kernel(%arg0: i32, %arg1: i32, %arg2: i32, %arg3: memref<4xi32, #tpu.memory_space<smem>>, %arg4: memref<4xi32, #tpu.memory_space<smem>>, %arg5: memref<16x1xi32, #tpu.memory_space<vmem>>, %arg6: memref<16x32xf32, #tpu.memory_space<vmem>>, %arg7: memref<4x32x128xf32, #tpu.memory_space<vmem>>, %arg8: memref<4x1x128xf32, #tpu.memory_space<vmem>>, %arg9: memref<16x128xf32, #tpu.memory_space<vmem>>) attributes {dimension_semantics = [#tpu.dimension_semantics<parallel>, #tpu.dimension_semantics<parallel>, #tpu.dimension_semantics<arbitrary>], iteration_bounds = array<i64: 1, 1, 4>, scalar_prefetch = 2 : i64, scratch_operands = 0 : i64, tpu.core_type = #tpu.core_type<tc>, window_params = [{transform_indices = @transform_0, window_bounds = array<i64: 16, 1>}, {transform_indices = @transform_1, window_bounds = array<i64: 16, 32>}, {transform_indices = @transform_2, window_bounds = array<i64: 4, 32, 128>}, {transform_indices = @transform_3, window_bounds = array<i64: 4, 1, 128>}, {transform_indices = @transform_4, window_bounds = array<i64: 16, 128>}]} {
    %c0_i32 = arith.constant 0 : i32
    %0 = arith.cmpi eq, %arg2, %c0_i32 : i32
    %1 = arith.extui %0 : i1 to i32
    %c0_i32_0 = arith.constant 0 : i32
    %2 = arith.cmpi ne, %1, %c0_i32_0 : i32
    scf.if %2 {
      %cst = arith.constant 0x7FC00000 : f32
      %10 = vector.broadcast %cst : f32 to vector<16x128xf32>
      %c0 = arith.constant 0 : index
      %c0_3 = arith.constant 0 : index
      %11 = vector.load %arg9[%c0, %c0_3] : memref<16x128xf32, #tpu.memory_space<vmem>>, vector<16x128xf32>
      tpu.vector_store %arg9[%c0, %c0_3], %10 {strides = array<i32>} : memref<16x128xf32, #tpu.memory_space<vmem>>, vector<16x128xf32>,
    } else {
    }
    %c4_i32 = arith.constant 4 : i32
    %3 = arith.muli %arg0, %c4_i32 : i32
    %4 = arith.addi %3, %arg2 : i32
    %5 = arith.index_cast %4 : i32 to index
    %6 = memref.load %arg3[%5] : memref<4xi32, #tpu.memory_space<smem>>
    %c0_i32_1 = arith.constant 0 : i32
    %7 = arith.cmpi sgt, %6, %c0_i32_1 : i32
    %8 = arith.extui %7 : i1 to i32
    %c0_i32_2 = arith.constant 0 : i32
    %9 = arith.cmpi ne, %8, %c0_i32_2 : i32
    scf.if %9 {
      %10 = arith.index_cast %arg2 : i32 to index
      %c0 = arith.constant 0 : index
      %c0_3 = arith.constant 0 : index
      %11 = vector.load %arg7[%10, %c0, %c0_3] : memref<4x32x128xf32, #tpu.memory_space<vmem>>, vector<1x32x128xf32>
      %12 = vector.shape_cast %11 : vector<1x32x128xf32> to vector<32x128xf32>
      %13 = arith.index_cast %arg2 : i32 to index
      %c0_4 = arith.constant 0 : index
      %c0_5 = arith.constant 0 : index
      %14 = vector.load %arg8[%13, %c0_4, %c0_5] : memref<4x1x128xf32, #tpu.memory_space<vmem>>, vector<1x1x128xf32>
      %15 = vector.shape_cast %14 : vector<1x1x128xf32> to vector<1x128xf32>
      %c0_6 = arith.constant 0 : index
      %c0_7 = arith.constant 0 : index
      %16 = vector.load %arg6[%c0_6, %c0_7] : memref<16x32xf32, #tpu.memory_space<vmem>>, vector<16x32xf32>
      %cst = arith.constant dense<0.000000e+00> : vector<16x128xf32>
      %17 = tpu.matmul %16, %12, %cst {dimension_numbers = #tpu.dot_dimension_numbers<[1], [0], [0], [1], [0, 0, 1, 1], [], []>} : vector<16x32xf32>, vector<32x128xf32>, vector<16x128xf32> -> vector<16x128xf32>
      %18 = vector.broadcast %15 : vector<1x128xf32> to vector<16x128xf32>
      %19 = arith.addf %17, %18 : vector<16x128xf32>
      %c0_8 = arith.constant 0 : index
      %c0_9 = arith.constant 0 : index
      %20 = vector.load %arg5[%c0_8, %c0_9] : memref<16x1xi32, #tpu.memory_space<vmem>>, vector<16x1xi32>
      %21 = vector.broadcast %arg2 : i32 to vector<16x1xi32>
      %22 = arith.cmpi eq, %20, %21 : vector<16x1xi32>
      %c0_10 = arith.constant 0 : index
      %c0_11 = arith.constant 0 : index
      %23 = vector.load %arg9[%c0_10, %c0_11] : memref<16x128xf32, #tpu.memory_space<vmem>>, vector<16x128xf32>
      %24 = vector.shape_cast %22 : vector<16x1xi1> to vector<16x1xi1>
      %25 = vector.broadcast %24 : vector<16x1xi1> to vector<16x128xi1>
      %26 = arith.select %25, %19, %23 : vector<16x128xi1>, vector<16x128xf32>
      %c0_12 = arith.constant 0 : index
      %c0_13 = arith.constant 0 : index
      %27 = vector.load %arg9[%c0_12, %c0_13] : memref<16x128xf32, #tpu.memory_space<vmem>>, vector<16x128xf32>
      tpu.vector_store %arg9[%c0_12, %c0_13], %26 {strides = array<i32>} : memref<16x128xf32, #tpu.memory_space<vmem>>, vector<16x128xf32>,
    } else {
    }
    return
  }
  func.func @transform_0(%arg0: i32, %arg1: i32, %arg2: i32, %arg3: memref<4xi32, #tpu.memory_space<smem>>, %arg4: memref<4xi32, #tpu.memory_space<smem>>) -> (i32, i32) {
    %c0_i32 = arith.constant 0 : i32
    %c0_i32_0 = arith.constant 0 : i32
    return %arg0, %c0_i32 : i32, i32
  }
  func.func @transform_1(%arg0: i32, %arg1: i32, %arg2: i32, %arg3: memref<4xi32, #tpu.memory_space<smem>>, %arg4: memref<4xi32, #tpu.memory_space<smem>>) -> (i32, i32) {
    %c0_i32 = arith.constant 0 : i32
    %c0_i32_0 = arith.constant 0 : i32
    return %arg0, %c0_i32 : i32, i32
  }
  func.func @transform_2(%arg0: i32, %arg1: i32, %arg2: i32, %arg3: memref<4xi32, #tpu.memory_space<smem>>, %arg4: memref<4xi32, #tpu.memory_space<smem>>) -> (i32, i32, i32) {
    %c0_i32 = arith.constant 0 : i32
    %c0_i32_0 = arith.constant 0 : i32
    %c0_i32_1 = arith.constant 0 : i32
    return %c0_i32, %c0_i32_0, %arg1 : i32, i32, i32
  }
  func.func @transform_3(%arg0: i32, %arg1: i32, %arg2: i32, %arg3: memref<4xi32, #tpu.memory_space<smem>>, %arg4: memref<4xi32, #tpu.memory_space<smem>>) -> (i32, i32, i32) {
    %c0_i32 = arith.constant 0 : i32
    %c0_i32_0 = arith.constant 0 : i32
    %c0_i32_1 = arith.constant 0 : i32
    return %c0_i32, %c0_i32_0, %arg1 : i32, i32, i32
  }
  func.func @transform_4(%arg0: i32, %arg1: i32, %arg2: i32, %arg3: memref<4xi32, #tpu.memory_space<smem>>, %arg4: memref<4xi32, #tpu.memory_space<smem>>) -> (i32, i32) {
    %c0_i32 = arith.constant 0 : i32
    return %arg0, %arg1 : i32, i32
  }
}

</mosaic_0001>

<llo_original>
// kernel: tpu_custom_call.1
$region0: #{tpu_custom_call.1}
  #allocation0 [shape = 'u32[]', space=smem, size = 0x4, offset = 0x4, fixed_abs, tag = 'smem constant byte address 0x4 - core index']
  #allocation1 [shape = 'u32[144,128]{1,0:T(1,128)}', space=vmem, size = 0x12000, scoped, tag = 'internal scratch']
  #allocation2 [shape = 's32[1]{0}', space=sflag, size = 0x4, scoped, tag = 'scoped memory for tpu_custom_call.1']
  #allocation3 [shape = 'u8[512]{0}', space=smem, size = 0x200, scoped, tag = 'prefetched SMEM operand 0']
  #allocation4 [shape = 'u8[512]{0}', space=smem, size = 0x200, scoped, tag = 'prefetched SMEM operand 1']
  %s0 = inlined_call_operand.vmem [shape: s32[4], index: 0, kind: input, shape index: {}]
  %s1 = inlined_call_operand.vmem [shape: s32[4], index: 1, kind: input, shape index: {}]
  %s2 = inlined_call_operand.vmem [shape: s32[16,1], index: 2, kind: input, shape index: {}]
  %s3 = inlined_call_operand.vmem [shape: f32[16,32], index: 3, kind: input, shape index: {}]
  %s4 = inlined_call_operand.hbm [shape: f32[4,32,128], index: 4, kind: input, shape index: {}]
  %s5 = inlined_call_operand.vmem [shape: f32[4,1,128], index: 5, kind: input, shape index: {}]
  %s6 = inlined_call_operand.hbm [shape: f32[16,128], index: 6, kind: output, shape index: {}]
  %s7 = sld [smem:[#allocation0]]
  $region61: #{tpu_custom_call.1} parent=0
    _
  %s9 = ssub.s32 1, %s7
  %s10 = scalar_select 0, %s9, %s7
  %s11 = sshll.u32 %s0, 4
  %s12 = int_to_ptr.vmem [resolvable:$true] %s11
  %14 = dma.vmem_to_smem %s12, 16, [#allocation3], [#allocation2]
  %s15 = sshll.u32 %s1, 4
  %s16 = int_to_ptr.vmem [resolvable:$true] %s15
  %18 = dma.vmem_to_smem %s16, 16, [#allocation4], [#allocation2]
  %19 = dma.done [#allocation2], 32
  %20 = sfence
  $region1: #{tpu_custom_call.1} parent=0
    #allocation5 [shape = 'u8[65536]{0}', space=vmem, size = 0x10000, scoped, tag = 'input window, operand 4, single buffered']
    #allocation6 [shape = 's32[2]{0}', space=sflag, size = 0x8, scoped, tag = 'scoped memory for tpu_custom_call.1']
    #allocation7 [shape = 's32[2]{0}', space=sflag, size = 0x8, scoped, tag = 'scoped memory for tpu_custom_call.1']
    #allocation8 [shape = 'u8[8192]{0}', space=vmem, size = 0x2000, scoped, tag = 'output window, operand 0, single buffered']
    %21 = vsyncpa [#allocation6], 0
    %22 = vsyncpa [#allocation7], 0
    loop: start=0, step=1, limit=6
    $region2: #{tpu_custom_call.1} parent=1 // loop_pre_header
      _
    $region3: #{tpu_custom_call.1} parent=1 // loop_header
      %s24 = sphi 0, %s28
      %p25 = scmp.ge.s32.totalorder %s24, 6
      %s31 = sphi 0, %s50
      %s32 = sphi 0, %s46
      %s33 = sphi 0, %s42
      %s34 = sphi 0, %s31
      %s35 = sphi 0, %s32
      %s36 = sphi 0, %s33
      %s37 = sphi 0, %s34
      %s38 = sphi 0, %s35
      %s39 = sphi 0, %s36
      %s53 = sphi 0, %s55
      %s56 = sphi 0, %s53
      %s57 = sphi 0, %s56
      %s73 = sphi 0, %s57
      %s79 = sphi 0, %s81
      %s82 = sphi 0, %s79
      %s83 = sphi 0, %s82
      %s99 = sphi 0, %s83
      %s105 = sphi 0, %s107
      %s108 = sphi 0, %s105
      %s109 = sphi 0, %s108
      %s125 = sphi 0, %s109
      %s131 = sphi 0, %s133
      %s134 = sphi 0, %s131
      %s135 = sphi 0, %s134
      %s151 = sphi 0, %s135
      %s159 = sphi 0, %s161
      %s162 = sphi 0, %s159
      %s163 = sphi 0, %s162
      %s179 = sphi 0, %s163
    $region4: #{tpu_custom_call.1} parent=1 // loop_header_branch
      %27 = sbr.rel (%p25) target = $region8
    $region5: #{tpu_custom_call.1} parent=1 // loop_body
      %s29 = ssub.s32 %s24, 1
      %s30 = ssub.s32 %s24, 2
      %s40 = sadd.s32 1, %s33
      %p41 = scmp.ge.s32.totalorder %s40, 4
      %s42 = scalar_select %p41, 0, %s40
      %s43 = sadd.s32 1, %s32
      %s44 = scalar_select %p41, %s43, %s32
      %p45 = scmp.ge.s32.totalorder %s44, 1
      %s46 = scalar_select %p45, 0, %s44
      %s47 = sadd.s32 1, %s31
      %s48 = scalar_select %p45, %s47, %s31
      %p49 = scmp.ge.s32.totalorder %s48, 1
      %s50 = scalar_select %p49, 0, %s48
      %s51 = ssub.s32 %s31, %s50
      %p52 = scmp.eq.s32.totalorder %s51, 0
      %s54 = sadd.s32 %s53, 1
      %s55 = scalar_select %p52, %s53, %s54
      %p58 = pneg %p52
      %p59 = scmp.eq.s32.totalorder %s24, 3
      %p60 = por %p58, %p59
      %p61 = scmp.ne.s32.totalorder %s53, %s56
      %p62 = scmp.eq.s32.totalorder %s24, 0
      %p63 = por %p61, %p62
      %p64 = scmp.ne.s32.totalorder %s53, %s56
      %p65 = scmp.eq.s32.totalorder %s29, 3
      %p66 = por %p64, %p65
      %p67 = scmp.ne.s32.totalorder %s56, %s57
      %p68 = scmp.eq.s32.totalorder %s29, 0
      %p69 = por %p67, %p68
      %p70 = scmp.ne.s32.totalorder %s56, %s57
      %p71 = scmp.eq.s32.totalorder %s30, 3
      %p72 = por %p70, %p71
      %p74 = scmp.ne.s32.totalorder %s57, %s73
      %p75 = scmp.eq.s32.totalorder %s30, 0
      %p76 = por %p74, %p75
      %s77 = ssub.s32 %s31, %s50
      %p78 = scmp.eq.s32.totalorder %s77, 0
      %s80 = sadd.s32 %s79, 1
      %s81 = scalar_select %p78, %s79, %s80
      %p84 = pneg %p78
      %p85 = scmp.eq.s32.totalorder %s24, 3
      %p86 = por %p84, %p85
      %p87 = scmp.ne.s32.totalorder %s79, %s82
      %p88 = scmp.eq.s32.totalorder %s24, 0
      %p89 = por %p87, %p88
      %p90 = scmp.ne.s32.totalorder %s79, %s82
      %p91 = scmp.eq.s32.totalorder %s29, 3
      %p92 = por %p90, %p91
      %p93 = scmp.ne.s32.totalorder %s82, %s83
      %p94 = scmp.eq.s32.totalorder %s29, 0
      %p95 = por %p93, %p94
      %p96 = scmp.ne.s32.totalorder %s82, %s83
      %p97 = scmp.eq.s32.totalorder %s30, 3
      %p98 = por %p96, %p97
      %p100 = scmp.ne.s32.totalorder %s83, %s99
      %p101 = scmp.eq.s32.totalorder %s30, 0
      %p102 = por %p100, %p101
      %s103 = ssub.s32 %s32, %s46
      %p104 = scmp.eq.s32.totalorder %s103, 0
      %s106 = sadd.s32 %s105, 1
      %s107 = scalar_select %p104, %s105, %s106
      %p110 = pneg %p104
      %p111 = scmp.eq.s32.totalorder %s24, 3
      %p112 = por %p110, %p111
      %p113 = scmp.ne.s32.totalorder %s105, %s108
      %p114 = scmp.eq.s32.totalorder %s24, 0
      %p115 = por %p113, %p114
      %p116 = scmp.ne.s32.totalorder %s105, %s108
      %p117 = scmp.eq.s32.totalorder %s29, 3
      %p118 = por %p116, %p117
      %p119 = scmp.ne.s32.totalorder %s108, %s109
      %p120 = scmp.eq.s32.totalorder %s29, 0
      %p121 = por %p119, %p120
      %p122 = scmp.ne.s32.totalorder %s108, %s109
      %p123 = scmp.eq.s32.totalorder %s30, 3
      %p124 = por %p122, %p123
      %p126 = scmp.ne.s32.totalorder %s109, %s125
      %p127 = scmp.eq.s32.totalorder %s30, 0
      %p128 = por %p126, %p127
      %s129 = ssub.s32 %s32, %s46
      %p130 = scmp.eq.s32.totalorder %s129, 0
      %s132 = sadd.s32 %s131, 1
      %s133 = scalar_select %p130, %s131, %s132
      %p136 = pneg %p130
      %p137 = scmp.eq.s32.totalorder %s24, 3
      %p138 = por %p136, %p137
      %p139 = scmp.ne.s32.totalorder %s131, %s134
      %p140 = scmp.eq.s32.totalorder %s24, 0
      %p141 = por %p139, %p140
      %p142 = scmp.ne.s32.totalorder %s131, %s134
      %p143 = scmp.eq.s32.totalorder %s29, 3
      %p144 = por %p142, %p143
      %p145 = scmp.ne.s32.totalorder %s134, %s135
      %p146 = scmp.eq.s32.totalorder %s29, 0
      %p147 = por %p145, %p146
      %p148 = scmp.ne.s32.totalorder %s134, %s135
      %p149 = scmp.eq.s32.totalorder %s30, 3
      %p150 = por %p148, %p149
      %p152 = scmp.ne.s32.totalorder %s135, %s151
      %p153 = scmp.eq.s32.totalorder %s30, 0
      %p154 = por %p152, %p153
      %s155 = ssub.s32 %s31, %s50
      %s156 = ssub.s32 %s32, %s46
      %s157 = sor.u32 %s155, %s156
      %p158 = scmp.eq.s32.totalorder %s157, 0
      %s160 = sadd.s32 %s159, 1
      %s161 = scalar_select %p158, %s159, %s160
      %p164 = pneg %p158
      %p165 = scmp.eq.s32.totalorder %s24, 3
      %p166 = por %p164, %p165
      %p167 = scmp.ne.s32.totalorder %s159, %s162
      %p168 = scmp.eq.s32.totalorder %s24, 0
      %p169 = por %p167, %p168
      %p170 = scmp.ne.s32.totalorder %s159, %s162
      %p171 = scmp.eq.s32.totalorder %s29, 3
      %p172 = por %p170, %p171
      %p173 = scmp.ne.s32.totalorder %s162, %s163
      %p174 = scmp.eq.s32.totalorder %s29, 0
      %p175 = por %p173, %p174
      %p176 = scmp.ne.s32.totalorder %s162, %s163
      %p177 = scmp.eq.s32.totalorder %s30, 3
      %p178 = por %p176, %p177
      %p180 = scmp.ne.s32.totalorder %s163, %s179
      %p181 = scmp.eq.s32.totalorder %s30, 0
      %p182 = por %p180, %p181
      %p183 = scmp.le.s32.totalorder 1, %s24
      %p184 = scmp.lt.s32.totalorder %s24, 5
      %p185 = pnand %p183, %p184
      %p186 = pneg %p185
      // Predicated region
      $region9: #{tpu_custom_call.1} parent=5 // pred_check
        _
      $region10: #{tpu_custom_call.1} parent=5 // pred_check_branch
        %188 = sbr.rel (%p185) target = $region12
      $region11: #{tpu_custom_call.1} parent=5 // pred_region
        %s189 = ssub.s32 %s24, 1
        // Predicated region
        $region13: #{tpu_custom_call.1} parent=11 // pred_check
          %p190 = pneg %p69
        $region14: #{tpu_custom_call.1} parent=11 // pred_check_branch
          %192 = sbr.rel (%p190) target = $region16
        $region15: #{tpu_custom_call.1} parent=11 // pred_region
          %s193 = smul.u32 2, %s34
          %p194 = scmp.lt.s32.totalorder %s193, 1
          %s195 = scalar_select %p194, %s193, 1
          %s196 = smul.addr %s195, 8
          %s197 = scalar_lea.vmem %s2, %s196
          %s198 = smul.u32 2, %s34
        $region16: #{tpu_custom_call.1} parent=11 // pred_fallthru
          _
        // Predicated region
        $region17: #{tpu_custom_call.1} parent=11 // pred_check
          %p199 = pneg %p95
        $region18: #{tpu_custom_call.1} parent=11 // pred_check_branch
          %201 = sbr.rel (%p199) target = $region20
        $region19: #{tpu_custom_call.1} parent=11 // pred_region
          %s202 = smul.u32 2, %s34
          %p203 = scmp.lt.s32.totalorder %s202, 1
          %s204 = scalar_select %p203, %s202, 1
          %s205 = smul.addr %s204, 8
          %s206 = scalar_lea.vmem %s3, %s205
          %s207 = smul.u32 2, %s34
        $region20: #{tpu_custom_call.1} parent=11 // pred_fallthru
          _
        // Predicated region
        $region21: #{tpu_custom_call.1} parent=11 // pred_check
          %p208 = pneg %p121
        $region22: #{tpu_custom_call.1} parent=11 // pred_check_branch
          %210 = sbr.rel (%p208) target = $region24
        $region23: #{tpu_custom_call.1} parent=11 // pred_region
          %s212 = ssub.s32 2048, 2048
          %213 = vsyncadd [#allocation6], %s212
          %s214 = smul.addr %s35, 128
          %s215 = scalar_lea.hbm %s4, %s214
          %s216 = sshll.u32 [#allocation5], 4
          %s217 = int_to_ptr.vmem [resolvable:$true] %s216
          %222 = dma.hbm_to_vmem [thread:$0]  %s215, 2048, %s217, [#allocation6], 128, 128, 8
        $region24: #{tpu_custom_call.1} parent=11 // pred_fallthru
          _
        // Predicated region
        $region25: #{tpu_custom_call.1} parent=11 // pred_check
          %p223 = pneg %p147
        $region26: #{tpu_custom_call.1} parent=11 // pred_check_branch
          %225 = sbr.rel (%p223) target = $region28
        $region27: #{tpu_custom_call.1} parent=11 // pred_region
          %p226 = scmp.lt.s32.totalorder %s35, 0
          %s227 = scalar_select %p226, %s35, 0
          %s228 = scalar_lea.vmem %s5, %s227
        $region28: #{tpu_custom_call.1} parent=11 // pred_fallthru
          _
      $region12: #{tpu_custom_call.1} parent=5 // pred_fallthru
        _
      %p229 = scmp.lt.s32.totalorder %s24, 4
      // Predicated region
      $region29: #{tpu_custom_call.1} parent=5 // pred_check
        %p230 = pneg %p229
      $region30: #{tpu_custom_call.1} parent=5 // pred_check_branch
        %232 = sbr.rel (%p230) target = $region32
      $region31: #{tpu_custom_call.1} parent=5 // pred_region
        _
      $region32: #{tpu_custom_call.1} parent=5 // pred_fallthru
        _
      %p233 = scmp.le.s32.totalorder 1, %s24
      %p234 = scmp.lt.s32.totalorder %s24, 5
      %p235 = pnand %p233, %p234
      %p236 = pneg %p235
      // Predicated region
      $region33: #{tpu_custom_call.1} parent=5 // pred_check
        _
      $region34: #{tpu_custom_call.1} parent=5 // pred_check_branch
        %238 = sbr.rel (%p235) target = $region36
      $region35: #{tpu_custom_call.1} parent=5 // pred_region
        %s239 = ssub.s32 %s24, 1
        // Predicated region
        $region37: #{tpu_custom_call.1} parent=35 // pred_check
          %p240 = pneg %p121
        $region38: #{tpu_custom_call.1} parent=35 // pred_check_branch
          %242 = sbr.rel (%p240) target = $region40
        $region39: #{tpu_custom_call.1} parent=35 // pred_region
          %243 = dma.done [#allocation6], 2048
        $region40: #{tpu_custom_call.1} parent=35 // pred_fallthru
          _
        %s244 = smul.u32 2, %s34
        %p245 = scmp.lt.s32.totalorder %s244, 1
        %s246 = scalar_select %p245, %s244, 1
        %s247 = smul.addr %s246, 8
        %s248 = scalar_lea.vmem %s2, %s247
        %p249 = pneg %p69
        %p250 = pneg %p66
        %s251 = smul.u32 2, %s34
        %p252 = scmp.lt.s32.totalorder %s251, 1
        %s253 = scalar_select %p252, %s251, 1
        %s254 = smul.addr %s253, 8
        %s255 = scalar_lea.vmem %s3, %s254
        %p256 = pneg %p95
        %p257 = pneg %p92
        %p258 = pneg %p121
        %p259 = pneg %p118
        %p260 = scmp.lt.s32.totalorder %s35, 0
        %s261 = scalar_select %p260, %s35, 0
        %s262 = scalar_lea.vmem %s5, %s261
        %p263 = pneg %p147
        %p264 = pneg %p144
        %p265 = pneg %p175
        %p266 = pneg %p172
        %s267 = smul.u32 2, %s34
        %p268 = scmp.lt.s32.totalorder %s267, 1
        %s269 = scalar_select %p268, %s267, 1
        %s270 = smul.addr %s269, 8
        %s271 = scalar_lea.vmem %s2, %s270
        %s272 = smul.u32 2, %s34
        %s273 = smul.u32 2, %s34
        %p274 = scmp.lt.s32.totalorder %s273, 1
        %s275 = scalar_select %p274, %s273, 1
        %s276 = smul.addr %s275, 8
        %s277 = scalar_lea.vmem %s3, %s276
        %s278 = smul.u32 2, %s34
        %p279 = scmp.lt.s32.totalorder %s35, 0
        %s280 = scalar_select %p279, %s35, 0
        %s281 = scalar_lea.vmem %s5, %s280
        %s282 = smul.u32 2, %s34
        %p283 = scmp.eq.s32.totalorder %s36, 0
        // Predicated region
        $region41: #{tpu_custom_call.1} parent=35 // pred_check
          %p284 = pneg %p283
        $region42: #{tpu_custom_call.1} parent=35 // pred_check_branch
          %286 = sbr.rel (%p284) target = $region44
        $region43: #{tpu_custom_call.1} parent=35 // pred_region
          %287 = vst [vmem:[#allocation8] sm:$0xff] nan
          %288 = vst [vmem:[#allocation8 + $0x8] sm:$0xff] nan
        $region44: #{tpu_custom_call.1} parent=35 // pred_fallthru
          _
        %s289 = smul.u32 %s34, 4
        %s290 = sadd.s32 %s289, %s36
        %s291 = sld [smem:[#allocation3 + %s290]]
        %p292 = scmp.gt.s32.totalorder %s291, 0
        // Predicated region
        $region45: #{tpu_custom_call.1} parent=35 // pred_check
          %p293 = pneg %p292
        $region46: #{tpu_custom_call.1} parent=35 // pred_check_branch
          %295 = sbr.rel (%p293) target = $region48
        $region47: #{tpu_custom_call.1} parent=35 // pred_region
          %s296 = smul.u32 %s36, 32
          %s297 = scalar_lea.vmem [#allocation5], %s296
          %v298 = vld [vmem:[%s297] sm:$0xff]
          %v299 = vld [vmem:[%s297 + $0x8] sm:$0xff]
          %v300 = vld [vmem:[%s297 + $0x10] sm:$0xff]
          %v301 = vld [vmem:[%s297 + $0x18] sm:$0xff]
          %s302 = scalar_lea.vmem %s281, %s36
          %v303 = vld [vmem:[%s302] sm:$0x1]
          %v304 = vld [vmem:[%s277] sm:$0xff]
          %v305 = vld [vmem:[%s277 + $0x8] sm:$0xff]
          %v307 = vlaneseq
          %v308 = vshrl.u32 %v307, 7
          %v309 = vsub.s32 0, %v308
          %v310 = vrot.slane %v303, %v309
          %vm312 = vcmask 261120
          %v314 = vsel %vm312, %v304, 0
          %v317 = vsel %vm312, %v305, 0
          %319 = vmatprep.subr.mxu0 0.0
          %320 = vmatpush1.msra.mxu0 %v298
          %321 = vmatprep.subr.mxu0 0.0
          %322 = vmatpush1.msra.mxu0 %v299
          %323 = vmatprep.subr.mxu0 0.0
          %324 = vmatpush1.msra.mxu0 %v300
          %325 = vmatprep.subr.mxu0 0.0
          %326 = vmatpush1.msra.mxu0 %v301
          %327 = vmatprep.subr.mxu0 0.0
          %328 = vmatpush1.msra.mxu0 0.0
          %329 = vmatprep.subr.mxu0 0.0
          %330 = vmatpush1.msra.mxu0 0.0
          %331 = vmatprep.subr.mxu0 0.0
          %332 = vmatpush1.msra.mxu0 0.0
          %333 = vmatprep.subr.mxu0 0.0
          %334 = vmatpush1.msra.mxu0 0.0
          %335 = vmatprep.subr.mxu0 0.0
          %336 = vmatpush1.msra.mxu0 0.0
          %337 = vmatprep.subr.mxu0 0.0
          %338 = vmatpush1.msra.mxu0 0.0
          %339 = vmatprep.subr.mxu0 0.0
          %340 = vmatpush1.msra.mxu0 0.0
          %341 = vmatprep.subr.mxu0 0.0
          %342 = vmatpush1.msra.mxu0 0.0
          %343 = vmatprep.subr.mxu0 0.0
          %344 = vmatpush1.msra.mxu0 0.0
          %345 = vmatprep.subr.mxu0 0.0
          %346 = vmatpush1.msra.mxu0 0.0
          %347 = vmatprep.subr.mxu0 0.0
          %348 = vmatpush1.msra.mxu0 0.0
          %349 = vmatprep.subr.mxu0 0.0
          %350 = vmatpush1.msra.mxu0 0.0
          %351 = vmatprep.subr.mxu0 0.0
          %352 = vmatpush1.msra.mxu0 0.0
          %353 = vmatprep.subr.mxu0 0.0
          %354 = vmatpush1.msra.mxu0 0.0
          %355 = vmatprep.subr.mxu0 0.0
          %356 = vmatpush1.msra.mxu0 0.0
          %357 = vmatprep.subr.mxu0 0.0
          %358 = vmatpush1.msra.mxu0 0.0
          %359 = vmatprep.subr.mxu0 0.0
          %360 = vmatpush1.msra.mxu0 0.0
          %361 = vmatprep.subr.mxu0 0.0
          %362 = vmatpush1.msra.mxu0 0.0
          %363 = vmatprep.subr.mxu0 0.0
          %364 = vmatpush1.msra.mxu0 0.0
          %365 = vmatprep.subr.mxu0 0.0
          %366 = vmatpush1.msra.mxu0 0.0
          %367 = vmatprep.subr.mxu0 0.0
          %368 = vmatpush1.msra.mxu0 0.0
          %369 = vmatprep.subr.mxu0 0.0
          %370 = vmatpush1.msra.mxu0 0.0
          %371 = vmatprep.subr.mxu0 0.0
          %372 = vmatpush1.msra.mxu0 0.0
          %373 = vmatprep.subr.mxu0 0.0
          %374 = vmatpush1.msra.mxu0 0.0
          %375 = vmatprep.subr.mxu0 0.0
          %376 = vmatpush1.msra.mxu0 0.0
          %377 = vmatprep.subr.mxu0 0.0
          %378 = vmatpush1.msra.mxu0 0.0
          %379 = vmatprep.subr.mxu0 0.0
          %380 = vmatpush1.msra.mxu0 0.0
          %381 = vmatprep.subr.mxu0 0.0
          %382 = vmatpush1.msra.mxu0 0.0
          %383 = vmatprep.mubr.f32.mxu0 0.0
          %384 = vmatmul.mubr.f32.gmra.mrb[0].mxu0 %v314
          %v385 = vpop.f32.mrb[0].mxu0
          %v386 = vadd.f32 %v310, %v385
          %v387 = vpop.f32.mrb[0].mxu0
          %388 = vmatprep.mubr.f32.mxu0 0.0
          %389 = vmatmul.mubr.f32.gmra.mrb[0].mxu0 %v317
          %v390 = vpop.f32.mrb[0].mxu0
          %v391 = vadd.f32 %v310, %v390
          %v392 = vpop.f32.mrb[0].mxu0
          %393 = vdwg.mxu0
          %v394 = vld [vmem:[%s271] sm:$0xff]
          %v395 = vld [vmem:[%s271 + $0x8] sm:$0xff]
          %v396 = vstv %s36
          %vm397 = vcmp.eq.s32.totalorder %v394, %v396
          %vm398 = vcmp.eq.s32.totalorder %v395, %v396
          %v399 = vld [vmem:[#allocation8] sm:$0xff]
          %v400 = vld [vmem:[#allocation8 + $0x8] sm:$0xff]
          %v401 = vsel %vm397, 1, 0
          %v402 = vsel %vm398, 1, 0
          %403 = vset.pattern.permute.xlu0 0
          %404 = vperm.xlu0 %403, %v401
          %v405 = vpop.permute.xlu0 %404
          %406 = vset.pattern.permute.xlu0 0
          %407 = vperm.xlu0 %406, %v402
          %v408 = vpop.permute.xlu0 %407
          %vm409 = vcmp.eq.s32.totalorder %v405, 1
          %vm410 = vcmp.eq.s32.totalorder %v408, 1
          %v411 = vsel %vm409, %v386, %v399
          %v412 = vsel %vm410, %v391, %v400
          %413 = vst [vmem:[#allocation8] sm:$0xff] %v411
          %414 = vst [vmem:[#allocation8 + $0x8] sm:$0xff] %v412
        $region48: #{tpu_custom_call.1} parent=35 // pred_fallthru
          _
        // Predicated region
        $region49: #{tpu_custom_call.1} parent=35 // pred_check
          %p415 = pneg %p172
        $region50: #{tpu_custom_call.1} parent=35 // pred_check_branch
          %417 = sbr.rel (%p415) target = $region52
        $region51: #{tpu_custom_call.1} parent=35 // pred_region
          %s418 = smul.u32 2, %s34
          %s420 = ssub.s32 256, 256
          %421 = vsyncadd [#allocation7], %s420
          %s422 = sadd.s32 %s35, %s418
          %s423 = smul.addr %s422, 128
          %s424 = scalar_lea.hbm %s6, %s423
          %s425 = sshll.u32 [#allocation8], 4
          %s426 = int_to_ptr.vmem [resolvable:$true] %s425
          %431 = dma.vmem_to_hbm [thread:$0]  %s426, 256, %s424, [#allocation7], 128, 128, 8
        $region52: #{tpu_custom_call.1} parent=35 // pred_fallthru
          _
        // Predicated region
        $region53: #{tpu_custom_call.1} parent=35 // pred_check
          %p432 = pneg %p172
        $region54: #{tpu_custom_call.1} parent=35 // pred_check_branch
          %434 = sbr.rel (%p432) target = $region56
        $region55: #{tpu_custom_call.1} parent=35 // pred_region
          %435 = dma.done [#allocation7], 256
        $region56: #{tpu_custom_call.1} parent=35 // pred_fallthru
          _
      $region36: #{tpu_custom_call.1} parent=5 // pred_fallthru
        _
      %p436 = scmp.le.s32.totalorder 2, %s24
      // Predicated region
      $region57: #{tpu_custom_call.1} parent=5 // pred_check
        %p437 = pneg %p436
      $region58: #{tpu_custom_call.1} parent=5 // pred_check_branch
        %439 = sbr.rel (%p437) target = $region60
      $region59: #{tpu_custom_call.1} parent=5 // pred_region
        %s440 = ssub.s32 %s24, 2
      $region60: #{tpu_custom_call.1} parent=5 // pred_fallthru
        _
    $region6: #{tpu_custom_call.1} parent=1 // loop_footer
      %s28 = sadd.s32 1, %s24
    $region7: #{tpu_custom_call.1} parent=1 // loop_footer_branch
      %23 = sbr.rel target = $region3
    $region8: #{tpu_custom_call.1} parent=1 // loop_exit
      _
    %441 = vsyncpa [#allocation6], 1
    %s442 = scalar_lea.sflag [#allocation6], 1
    %443 = vsyncpa %s442, 1
    %444 = vsyncpa [#allocation7], 1
    %s445 = scalar_lea.sflag [#allocation7], 1
    %446 = vsyncpa %s445, 1

</llo_original>
